<compile_context>
chip_gen: v6e
topology: v6e:2x2x1
jax: 0.10.0
libtpu: 0.0.40
codegen_flags: <defaults>
</compile_context>

<pallas_src>
import jax
import jax.numpy as jnp
from jax.experimental import pallas as pl
from jax.experimental.pallas import tpu as pltpu


_LANE = 128        # TPU lane width
_SUBLANE = 8       # f32 sublane width (batch tile rounded to this)
_MAX_TB = 1024     # max batch rows per grid step (VMEM: x/out tiles stay << 4 MiB)
_MIN_SPLIT_TB = 128  # only force >=2 grid steps if each tile keeps at least this many rows


def _round_up(x, m):
    return (x + m - 1) // m * m


def _mlp_kernel(x_ref, w1_ref, b1_ref, w2_ref, b2_ref, w3_ref, b3_ref, o_ref):
    """Fused 3-layer MLP on one (TB, num_states) batch tile.

    MXU matmuls take bf16 operands and accumulate in f32; bias add and ReLU stay
    in f32 on the VPU.  Weights/biases are VMEM-resident across grid steps.
    """
    # x arrives as f32 straight from HBM (no wrapper pad/cast pass).
    x = x_ref[...].astype(jnp.bfloat16)                                # (TB, S)

    h1 = jnp.dot(x, w1_ref[...], preferred_element_type=jnp.float32) + b1_ref[...]
    h1 = jnp.maximum(h1, 0.0).astype(jnp.bfloat16)                     # (TB, D_pad)

    h2 = jnp.dot(h1, w2_ref[...], preferred_element_type=jnp.float32) + b2_ref[...]
    h2 = jnp.maximum(h2, 0.0).astype(jnp.bfloat16)                     # (TB, D_pad)

    out = jnp.dot(h2, w3_ref[...], preferred_element_type=jnp.float32) + b3_ref[...]
    o_ref[...] = out.astype(o_ref.dtype)                               # (TB, A) masked store


def prepare_params(params):
    """One-time padding/casting of the (tiny, static) weights.

    Call once and reuse the result for every forward pass; this removes the
    per-call pad/cast XLA ops and their HBM traffic from the hot path.
    """
    w1, b1 = params["w1"], params["b1"]
    w2, b2 = params["w2"], params["b2"]
    w3, b3 = params["w3"], params["b3"]

    num_states, dim = w1.shape
    num_actions = w3.shape[1]

    # Lane-align the hidden dim; use 256-alignment when dim is large enough to
    # matter for the v6e/v7x 256x256 MXU (128 is optimal for v5e's 128x128 MXU).
    mxu_align = 256 if dim >= 256 else _LANE
    d_pad = _round_up(dim, mxu_align)

    w1p = jnp.zeros((num_states, d_pad), jnp.bfloat16).at[:, :dim].set(
        w1.astype(jnp.bfloat16))
    w2p = jnp.zeros((d_pad, d_pad), jnp.bfloat16).at[:dim, :dim].set(
        w2.astype(jnp.bfloat16))
    w3p = jnp.zeros((d_pad, num_actions), jnp.bfloat16).at[:dim, :].set(
        w3.astype(jnp.bfloat16))
    b1p = jnp.zeros((1, d_pad), jnp.float32).at[:, :dim].set(b1.astype(jnp.float32))
    b2p = jnp.zeros((1, d_pad), jnp.float32).at[:, :dim].set(b2.astype(jnp.float32))
    b3p = b3.astype(jnp.float32).reshape(1, num_actions)

    return {"w1": w1p, "b1": b1p, "w2": w2p, "b2": b2p, "w3": w3p, "b3": b3p}


def nn_forward(x, prep):
    """Runs the fused, batch-tiled MLP Pallas kernel.

    x:    (batch, num_states) float32 (bf16 also accepted)
    prep: output of prepare_params(params)
    Returns (batch, num_actions) float32.
    """
    w1p, b1p = prep["w1"], prep["b1"]
    w2p, b2p = prep["w2"], prep["b2"]
    w3p, b3p = prep["w3"], prep["b3"]

    batch = x.shape[0]
    num_states, d_pad = w1p.shape
    num_actions = w3p.shape[1]
    assert x.shape[1] == num_states

    # ---- batch tiling: at most 7 padded rows per tile, >=2 tiles for v7x when
    # the batch is big enough for the split to be free ----
    b8 = _round_up(batch, _SUBLANE)
    n_tiles = pl.cdiv(b8, _MAX_TB)
    if n_tiles < 2 and b8 >= 2 * _MIN_SPLIT_TB:
        n_tiles = 2
    tb = _round_up(pl.cdiv(b8, n_tiles), _SUBLANE)
    grid = (n_tiles,)
    # Note: n_tiles * tb may exceed batch by a few rows; Pallas masks the ragged
    # last tile (OOB input rows are garbage but only feed OOB output rows, which
    # are dropped by the masked store).

    # ---- advisory cost estimate so XLA schedules neighbours around the call ----
    weight_bytes = (
        (w1p.size + w2p.size + w3p.size) * 2
        + (b1p.size + b2p.size + b3p.size) * 4
    )
    cost = pl.CostEstimate(
        flops=2 * batch * (num_states * d_pad + d_pad * d_pad + d_pad * num_actions),
        transcendentals=0,
        bytes_accessed=(
            batch * num_states * x.dtype.itemsize
            + batch * num_actions * 4
            + weight_bytes
        ),
    )

    return pl.pallas_call(
        _mlp_kernel,
        out_shape=jax.ShapeDtypeStruct((batch, num_actions), jnp.float32),
        grid=grid,
        in_specs=[
            pl.BlockSpec((tb, num_states), lambda i: (i, 0)),      # x: tiled over batch
            pl.BlockSpec((num_states, d_pad), lambda i: (0, 0)),   # weights/biases: VMEM-resident
            pl.BlockSpec((1, d_pad), lambda i: (0, 0)),
            pl.BlockSpec((d_pad, d_pad), lambda i: (0, 0)),
            pl.BlockSpec((1, d_pad), lambda i: (0, 0)),
            pl.BlockSpec((d_pad, num_actions), lambda i: (0, 0)),
            pl.BlockSpec((1, num_actions), lambda i: (0, 0)),
        ],
        out_specs=pl.BlockSpec((tb, num_actions), lambda i: (i, 0)),
        compiler_params=pltpu.CompilerParams(
            dimension_semantics=("parallel",),   # batch tiles shard across TCs on v7x
        ),
        cost_estimate=cost,
    )(x, w1p, b1p, w2p, b2p, w3p, b3p)


def init_params(key, num_states, num_actions, dim):
    """Deterministic synthetic parameters (PyTorch-style uniform fan-in init), f32."""
    ks = jax.random.split(key, 6)

    def lin(kw, kb, fan_in, fan_out):
        bound = 1.0 / jnp.sqrt(jnp.float32(fan_in))
        w = jax.random.uniform(kw, (fan_in, fan_out), jnp.float32, -bound, bound)
        b = jax.random.uniform(kb, (1, fan_out), jnp.float32, -bound, bound)
        return w, b

    w1, b1 = lin(ks[0], ks[1], num_states, dim)
    w2, b2 = lin(ks[2], ks[3], dim, dim)
    w3, b3 = lin(ks[4], ks[5], dim, num_actions)
    return {"w1": w1, "b1": b1, "w2": w2, "b2": b2, "w3": w3, "b3": b3}


def _reference_bf16(x, p):
    """Pure-JAX reference with the same bf16-operand / f32-accumulate policy."""
    h1 = jnp.maximum(
        jnp.dot(x.astype(jnp.bfloat16), p["w1"].astype(jnp.bfloat16),
                preferred_element_type=jnp.float32) + p["b1"], 0.0)
    h2 = jnp.maximum(
        jnp.dot(h1.astype(jnp.bfloat16), p["w2"].astype(jnp.bfloat16),
                preferred_element_type=jnp.float32) + p["b2"], 0.0)
    return jnp.dot(h2.astype(jnp.bfloat16), p["w3"].astype(jnp.bfloat16),
                   preferred_element_type=jnp.float32) + p["b3"]


def _reference_f32(x, p):
    h1 = jnp.maximum(x @ p["w1"] + p["b1"], 0.0)
    h2 = jnp.maximum(h1 @ p["w2"] + p["b2"], 0.0)
    return h2 @ p["w3"] + p["b3"]


if __name__ == "__main__":
    num_states, num_actions, dim = 16, 4, 32
    batch = 8

    key = jax.random.PRNGKey(0)
    k_x, k_p = jax.random.split(key)

    x = jax.random.normal(k_x, (batch, num_states), jnp.float32)
    params = init_params(k_p, num_states, num_actions, dim)

    prep = prepare_params(params)          # one-time pad/cast of weights
    out = nn_forward(x, prep)
    out = jax.block_until_ready(out)
    assert out.shape == (batch, num_actions)

    # Tight check against a reference with the same bf16/f32 mixed-precision policy,
    # plus a looser sanity check against the pure-f32 PyTorch-equivalent math.
    ref_bf16 = _reference_bf16(x, params)
    ref_f32 = _reference_f32(x, params)
    assert jnp.allclose(out, ref_bf16, atol=2e-2, rtol=2e-2)
    assert jnp.allclose(out, ref_f32, atol=5e-2, rtol=5e-2)

    print("KERNEL_OK")
</pallas_src>

<mosaic_0001>
module attributes {stable_mosaic.version = 11 : i64} {
  func.func @_mlp_kernel(%arg0: i32, %arg1: memref<8x16xf32, #tpu.memory_space<vmem>>, %arg2: memref<16x128xbf16, #tpu.memory_space<vmem>>, %arg3: memref<1x128xf32, #tpu.memory_space<vmem>>, %arg4: memref<128x128xbf16, #tpu.memory_space<vmem>>, %arg5: memref<1x128xf32, #tpu.memory_space<vmem>>, %arg6: memref<128x4xbf16, #tpu.memory_space<vmem>>, %arg7: memref<1x4xf32, #tpu.memory_space<vmem>>, %arg8: memref<8x4xf32, #tpu.memory_space<vmem>>) attributes {dimension_semantics = [#tpu.dimension_semantics<parallel>], iteration_bounds = array<i64: 1>, scalar_prefetch = 0 : i64, scratch_operands = 0 : i64, tpu.core_type = #tpu.core_type<tc>, window_params = [{transform_indices = @transform_0, window_bounds = array<i64: 8, 16>}, {pipeline_mode = #tpu.pipeline_mode<synchronous>, transform_indices = @transform_1, window_bounds = array<i64: 16, 128>}, {pipeline_mode = #tpu.pipeline_mode<synchronous>, transform_indices = @transform_2, window_bounds = array<i64: 1, 128>}, {pipeline_mode = #tpu.pipeline_mode<synchronous>, transform_indices = @transform_3, window_bounds = array<i64: 128, 128>}, {pipeline_mode = #tpu.pipeline_mode<synchronous>, transform_indices = @transform_4, window_bounds = array<i64: 1, 128>}, {pipeline_mode = #tpu.pipeline_mode<synchronous>, transform_indices = @transform_5, window_bounds = array<i64: 128, 4>}, {pipeline_mode = #tpu.pipeline_mode<synchronous>, transform_indices = @transform_6, window_bounds = array<i64: 1, 4>}, {transform_indices = @transform_7, window_bounds = array<i64: 8, 4>}]} {
    %c0 = arith.constant 0 : index
    %c0_0 = arith.constant 0 : index
    %0 = vector.load %arg1[%c0, %c0_0] : memref<8x16xf32, #tpu.memory_space<vmem>>, vector<8x16xf32>
    %1 = arith.truncf %0 : vector<8x16xf32> to vector<8x16xbf16>
    %c0_1 = arith.constant 0 : index
    %c0_2 = arith.constant 0 : index
    %2 = vector.load %arg2[%c0_1, %c0_2] : memref<16x128xbf16, #tpu.memory_space<vmem>>, vector<16x128xbf16>
    %cst = arith.constant dense<0.000000e+00> : vector<8x128xf32>
    %3 = tpu.matmul %1, %2, %cst {dimension_numbers = #tpu.dot_dimension_numbers<[1], [0], [0], [1], [0, 0, 1, 1], [], []>} : vector<8x16xbf16>, vector<16x128xbf16>, vector<8x128xf32> -> vector<8x128xf32>
    %c0_3 = arith.constant 0 : index
    %c0_4 = arith.constant 0 : index
    %4 = vector.load %arg3[%c0_3, %c0_4] : memref<1x128xf32, #tpu.memory_space<vmem>>, vector<1x128xf32>
    %5 = vector.broadcast %4 : vector<1x128xf32> to vector<8x128xf32>
    %6 = arith.addf %3, %5 : vector<8x128xf32>
    %cst_5 = arith.constant 0.000000e+00 : f32
    %7 = vector.broadcast %cst_5 : f32 to vector<8x128xf32>
    %8 = arith.maximumf %6, %7 : vector<8x128xf32>
    %9 = arith.truncf %8 : vector<8x128xf32> to vector<8x128xbf16>
    %c0_6 = arith.constant 0 : index
    %c0_7 = arith.constant 0 : index
    %10 = vector.load %arg4[%c0_6, %c0_7] : memref<128x128xbf16, #tpu.memory_space<vmem>>, vector<128x128xbf16>
    %cst_8 = arith.constant dense<0.000000e+00> : vector<8x128xf32>
    %11 = tpu.matmul %9, %10, %cst_8 {dimension_numbers = #tpu.dot_dimension_numbers<[1], [0], [0], [1], [0, 0, 1, 1], [], []>} : vector<8x128xbf16>, vector<128x128xbf16>, vector<8x128xf32> -> vector<8x128xf32>
    %c0_9 = arith.constant 0 : index
    %c0_10 = arith.constant 0 : index
    %12 = vector.load %arg5[%c0_9, %c0_10] : memref<1x128xf32, #tpu.memory_space<vmem>>, vector<1x128xf32>
    %13 = vector.broadcast %12 : vector<1x128xf32> to vector<8x128xf32>
    %14 = arith.addf %11, %13 : vector<8x128xf32>
    %cst_11 = arith.constant 0.000000e+00 : f32
    %15 = vector.broadcast %cst_11 : f32 to vector<8x128xf32>
    %16 = arith.maximumf %14, %15 : vector<8x128xf32>
    %17 = arith.truncf %16 : vector<8x128xf32> to vector<8x128xbf16>
    %c0_12 = arith.constant 0 : index
    %c0_13 = arith.constant 0 : index
    %18 = vector.load %arg6[%c0_12, %c0_13] : memref<128x4xbf16, #tpu.memory_space<vmem>>, vector<128x4xbf16>
    %cst_14 = arith.constant dense<0.000000e+00> : vector<8x4xf32>
    %19 = tpu.matmul %17, %18, %cst_14 {dimension_numbers = #tpu.dot_dimension_numbers<[1], [0], [0], [1], [0, 0, 1, 1], [], []>} : vector<8x128xbf16>, vector<128x4xbf16>, vector<8x4xf32> -> vector<8x4xf32>
    %c0_15 = arith.constant 0 : index
    %c0_16 = arith.constant 0 : index
    %20 = vector.load %arg7[%c0_15, %c0_16] : memref<1x4xf32, #tpu.memory_space<vmem>>, vector<1x4xf32>
    %21 = vector.broadcast %20 : vector<1x4xf32> to vector<8x4xf32>
    %22 = arith.addf %19, %21 : vector<8x4xf32>
    %c0_17 = arith.constant 0 : index
    %c0_18 = arith.constant 0 : index
    %23 = vector.load %arg8[%c0_17, %c0_18] : memref<8x4xf32, #tpu.memory_space<vmem>>, vector<8x4xf32>
    tpu.vector_store %arg8[%c0_17, %c0_18], %22 {strides = array<i32>} : memref<8x4xf32, #tpu.memory_space<vmem>>, vector<8x4xf32>,
    return
  }
  func.func @transform_0(%arg0: i32) -> (i32, i32) {
    %c0_i32 = arith.constant 0 : i32
    %c0_i32_0 = arith.constant 0 : i32
    return %arg0, %c0_i32 : i32, i32
  }
  func.func @transform_1(%arg0: i32) -> (i32, i32) {
    %c0_i32 = arith.constant 0 : i32
    %c0_i32_0 = arith.constant 0 : i32
    %c0_i32_1 = arith.constant 0 : i32
    return %c0_i32, %c0_i32_0 : i32, i32
  }
  func.func @transform_2(%arg0: i32) -> (i32, i32) {
    %c0_i32 = arith.constant 0 : i32
    %c0_i32_0 = arith.constant 0 : i32
    %c0_i32_1 = arith.constant 0 : i32
    return %c0_i32, %c0_i32_0 : i32, i32
  }
  func.func @transform_3(%arg0: i32) -> (i32, i32) {
    %c0_i32 = arith.constant 0 : i32
    %c0_i32_0 = arith.constant 0 : i32
    %c0_i32_1 = arith.constant 0 : i32
    return %c0_i32, %c0_i32_0 : i32, i32
  }
  func.func @transform_4(%arg0: i32) -> (i32, i32) {
    %c0_i32 = arith.constant 0 : i32
    %c0_i32_0 = arith.constant 0 : i32
    %c0_i32_1 = arith.constant 0 : i32
    return %c0_i32, %c0_i32_0 : i32, i32
  }
  func.func @transform_5(%arg0: i32) -> (i32, i32) {
    %c0_i32 = arith.constant 0 : i32
    %c0_i32_0 = arith.constant 0 : i32
    %c0_i32_1 = arith.constant 0 : i32
    return %c0_i32, %c0_i32_0 : i32, i32
  }
  func.func @transform_6(%arg0: i32) -> (i32, i32) {
    %c0_i32 = arith.constant 0 : i32
    %c0_i32_0 = arith.constant 0 : i32
    %c0_i32_1 = arith.constant 0 : i32
    return %c0_i32, %c0_i32_0 : i32, i32
  }
  func.func @transform_7(%arg0: i32) -> (i32, i32) {
    %c0_i32 = arith.constant 0 : i32
    %c0_i32_0 = arith.constant 0 : i32
    return %arg0, %c0_i32 : i32, i32
  }
}

</mosaic_0001>

<llo_original>
// kernel: tpu_custom_call.1
$region0: #{tpu_custom_call.1}
  #allocation0 [shape = 'u32[]', space=smem, size = 0x4, offset = 0x4, fixed_abs, tag = 'smem constant byte address 0x4 - core index']
  #allocation1 [shape = 'u32[144,128]{1,0:T(1,128)}', space=vmem, size = 0x12000, scoped, tag = 'internal scratch']
  %s0 = inlined_call_operand.hbm [shape: f32[8,16], index: 0, kind: input, shape index: {}]
  %s1 = inlined_call_operand.hbm [shape: bf16[16,128], index: 1, kind: input, shape index: {}]
  %s2 = inlined_call_operand.vmem [shape: f32[1,128], index: 2, kind: input, shape index: {}]
  %s3 = inlined_call_operand.vmem [shape: bf16[128,128], index: 3, kind: input, shape index: {}]
  %s4 = inlined_call_operand.vmem [shape: f32[1,128], index: 4, kind: input, shape index: {}]
  %s5 = inlined_call_operand.vmem [shape: bf16[128,4], index: 5, kind: input, shape index: {}]
  %s6 = inlined_call_operand.vmem [shape: f32[1,4], index: 6, kind: input, shape index: {}]
  %s7 = inlined_call_operand.vmem [shape: f32[8,4], index: 7, kind: output, shape index: {}]
  %s8 = sld [smem:[#allocation0]]
  $region46: #{tpu_custom_call.1} parent=0
    _
  %s10 = ssub.s32 1, %s8
  %s11 = scalar_select 0, %s10, %s8
  $region1: #{tpu_custom_call.1} parent=0
    #allocation2 [shape = 'u8[4096]{0}', space=vmem, size = 0x1000, scoped, tag = 'input window, operand 0, single buffered']
    #allocation3 [shape = 's32[1]{0}', space=sflag, size = 0x4, scoped, tag = 'scoped memory for tpu_custom_call.1']
    #allocation4 [shape = 'u8[4096]{0}', space=vmem, size = 0x1000, scoped, tag = 'input window, operand 1, single buffered']
    #allocation5 [shape = 's32[1]{0}', space=sflag, size = 0x4, scoped, tag = 'scoped memory for tpu_custom_call.1']
    %12 = vsyncpa [#allocation3], 0
    %13 = vsyncpa [#allocation5], 0
    // Predicated region
    $region2: #{tpu_custom_call.1} parent=1 // pred_check
      _
    $region3: #{tpu_custom_call.1} parent=1 // pred_check_branch
      %15 = sbr.rel (0) target = $region5
    $region4: #{tpu_custom_call.1} parent=1 // pred_region
      %s17 = ssub.s32 128, 128
      %18 = vsyncadd [#allocation3], %s17
      %s20 = sshll.u32 [#allocation2], 4
      %s21 = int_to_ptr.vmem [resolvable:$true] %s20
      %23 = dma.hbm_to_vmem [thread:$0]  %s0, 128, %s21, [#allocation3]
    $region5: #{tpu_custom_call.1} parent=1 // pred_fallthru
      _
    // Predicated region
    $region6: #{tpu_custom_call.1} parent=1 // pred_check
      _
    $region7: #{tpu_custom_call.1} parent=1 // pred_check_branch
      %25 = sbr.rel (0) target = $region9
    $region8: #{tpu_custom_call.1} parent=1 // pred_region
      %s27 = ssub.s32 128, 128
      %28 = vsyncadd [#allocation5], %s27
      %s29 = sshll.u32 [#allocation4], 4
      %s30 = int_to_ptr.vmem [resolvable:$true] %s29
      %35 = dma.hbm_to_vmem [thread:$0]  %s1, 128, %s30, [#allocation5], 64, 64, 4
    $region9: #{tpu_custom_call.1} parent=1 // pred_fallthru
      _
    // Predicated region
    $region10: #{tpu_custom_call.1} parent=1 // pred_check
      _
    $region11: #{tpu_custom_call.1} parent=1 // pred_check_branch
      %37 = sbr.rel (0) target = $region13
    $region12: #{tpu_custom_call.1} parent=1 // pred_region
      _
    $region13: #{tpu_custom_call.1} parent=1 // pred_fallthru
      _
    // Predicated region
    $region14: #{tpu_custom_call.1} parent=1 // pred_check
      _
    $region15: #{tpu_custom_call.1} parent=1 // pred_check_branch
      %39 = sbr.rel (0) target = $region17
    $region16: #{tpu_custom_call.1} parent=1 // pred_region
      _
    $region17: #{tpu_custom_call.1} parent=1 // pred_fallthru
      _
    // Predicated region
    $region18: #{tpu_custom_call.1} parent=1 // pred_check
      _
    $region19: #{tpu_custom_call.1} parent=1 // pred_check_branch
      %41 = sbr.rel (0) target = $region21
    $region20: #{tpu_custom_call.1} parent=1 // pred_region
      _
    $region21: #{tpu_custom_call.1} parent=1 // pred_fallthru
      _
    // Predicated region
    $region22: #{tpu_custom_call.1} parent=1 // pred_check
      _
    $region23: #{tpu_custom_call.1} parent=1 // pred_check_branch
      %43 = sbr.rel (0) target = $region25
    $region24: #{tpu_custom_call.1} parent=1 // pred_region
      _
    $region25: #{tpu_custom_call.1} parent=1 // pred_fallthru
      _
    // Predicated region
    $region26: #{tpu_custom_call.1} parent=1 // pred_check
      _
    $region27: #{tpu_custom_call.1} parent=1 // pred_check_branch
      %45 = sbr.rel (0) target = $region29
    $region28: #{tpu_custom_call.1} parent=1 // pred_region
      _
    $region29: #{tpu_custom_call.1} parent=1 // pred_fallthru
      _
    // Predicated region
    $region30: #{tpu_custom_call.1} parent=1 // pred_check
      _
    $region31: #{tpu_custom_call.1} parent=1 // pred_check_branch
      %47 = sbr.rel (0) target = $region33
    $region32: #{tpu_custom_call.1} parent=1 // pred_region
      %48 = dma.done [#allocation3], 128
    $region33: #{tpu_custom_call.1} parent=1 // pred_fallthru
      _
    // Predicated region
    $region34: #{tpu_custom_call.1} parent=1 // pred_check
      _
    $region35: #{tpu_custom_call.1} parent=1 // pred_check_branch
      %50 = sbr.rel (0) target = $region37
    $region36: #{tpu_custom_call.1} parent=1 // pred_region
      %51 = dma.done [#allocation5], 128
    $region37: #{tpu_custom_call.1} parent=1 // pred_fallthru
      _
    %v53 = vld [vmem:[#allocation2] sm:$0xff]
    %v54 = vpack.c.bf16 %v53, %v53
    %v55 = vld [vmem:[#allocation4] sm:$0xf]
    %v56 = vld [vmem:[#allocation4 + $0x4] sm:$0xf]
    %v57 = vld [vmem:[%s2] sm:$0x1]
    %v59 = vlaneseq
    %v60 = vshrl.u32 %v59, 7
    %v61 = vsub.s32 0, %v60
    %v62 = vrot.slane %v57, %v61
    %v66 = vunpack.c.l.b16 %v55
    %v67 = vunpack.c.l.b16 %v56
    %v68 = vpack.c.b16 %v67, %v66
    %vm70 = vcmask 130048
    %v72 = vsel %vm70, %v54, 0
    %74 = vmatprep.subr.bf16.mxu0 0
    %75 = vmatpush1.bf16.msra.mxu0 0
    %76 = vmatprep.subr.bf16.mxu0 0
    %77 = vmatpush1.bf16.msra.mxu0 0
    %78 = vmatprep.subr.bf16.mxu0 0
    %79 = vmatpush1.bf16.msra.mxu0 0
    %80 = vmatprep.subr.bf16.mxu0 0
    %81 = vmatpush1.bf16.msra.mxu0 0
    %82 = vmatprep.subr.bf16.mxu0 0
    %83 = vmatpush1.bf16.msra.mxu0 0
    %84 = vmatprep.subr.bf16.mxu0 0
    %85 = vmatpush1.bf16.msra.mxu0 0
    %86 = vmatprep.subr.bf16.mxu0 0
    %87 = vmatpush1.bf16.msra.mxu0 0
    %88 = vmatprep.subr.bf16.mxu0 0
    %89 = vmatpush1.bf16.msra.mxu0 %v68
    %90 = vmatprep.subr.bf16.mxu0 0
    %91 = vmatpush2.bf16.msra.mxu0 0
    %92 = vmatprep.subr.bf16.mxu0 0
    %93 = vmatpush2.bf16.msra.mxu0 0
    %94 = vmatprep.subr.bf16.mxu0 0
    %95 = vmatpush2.bf16.msra.mxu0 0
    %96 = vmatprep.subr.bf16.mxu0 0
    %97 = vmatpush2.bf16.msra.mxu0 0
    %98 = vmatprep.subr.bf16.mxu0 0
    %99 = vmatpush2.bf16.msra.mxu0 0
    %100 = vmatprep.subr.bf16.mxu0 0
    %101 = vmatpush2.bf16.msra.mxu0 0
    %102 = vmatprep.subr.bf16.mxu0 0
    %103 = vmatpush2.bf16.msra.mxu0 0
    %104 = vmatprep.subr.bf16.mxu0 0
    %105 = vmatpush2.bf16.msra.mxu0 0
    %106 = vmatprep.mubr.bf16.mxu0 0
    %107 = vmatmul.mubr.bf16.gmra.mxu0 %v72
    %v108 = vpop.f32.mrf.mxu0
    %v109 = vadd.f32 %v62, %v108
    %v110 = vpop.f32.mrf.mxu0
    %v111 = vpop.f32.mrf.mxu0
    %v112 = vpop.f32.mrf.mxu0
    %113 = vdwg.mxu0
    %v114 = vmax.f32 %v109, 0.0
    %v115 = vpack.c.bf16 %v114, %v114
    %v116 = vld [vmem:[%s3] sm:$0xf]
    %v117 = vld [vmem:[%s3 + $0x4] sm:$0xf]
    %v118 = vld [vmem:[%s3 + $0x8] sm:$0xf]
    %v119 = vld [vmem:[%s3 + $0xc] sm:$0xf]
    %v120 = vld [vmem:[%s3 + $0x10] sm:$0xf]
    %v121 = vld [vmem:[%s3 + $0x14] sm:$0xf]
    %v122 = vld [vmem:[%s3 + $0x18] sm:$0xf]
    %v123 = vld [vmem:[%s3 + $0x1c] sm:$0xf]
    %v124 = vld [vmem:[%s3 + $0x20] sm:$0xf]
    %v125 = vld [vmem:[%s3 + $0x24] sm:$0xf]
    %v126 = vld [vmem:[%s3 + $0x28] sm:$0xf]
    %v127 = vld [vmem:[%s3 + $0x2c] sm:$0xf]
    %v128 = vld [vmem:[%s3 + $0x30] sm:$0xf]
    %v129 = vld [vmem:[%s3 + $0x34] sm:$0xf]
    %v130 = vld [vmem:[%s3 + $0x38] sm:$0xf]
    %v131 = vld [vmem:[%s3 + $0x3c] sm:$0xf]
    %v132 = vld [vmem:[%s4] sm:$0x1]
    %v134 = vlaneseq
    %v135 = vshrl.u32 %v134, 7
    %v136 = vsub.s32 0, %v135
    %v137 = vrot.slane %v132, %v136
    %v155 = vunpack.c.l.b16 %v116
    %v156 = vunpack.c.l.b16 %v117
    %v157 = vunpack.c.l.b16 %v118
    %v158 = vunpack.c.l.b16 %v119
    %v159 = vunpack.c.l.b16 %v120
    %v160 = vunpack.c.l.b16 %v121
    %v161 = vunpack.c.l.b16 %v122
    %v162 = vunpack.c.l.b16 %v123
    %v163 = vunpack.c.l.b16 %v124
    %v164 = vunpack.c.l.b16 %v125
    %v165 = vunpack.c.l.b16 %v126
    %v166 = vunpack.c.l.b16 %v127
    %v167 = vunpack.c.l.b16 %v128
    %v168 = vunpack.c.l.b16 %v129
    %v169 = vunpack.c.l.b16 %v130
    %v170 = vunpack.c.l.b16 %v131
    %v171 = vpack.c.b16 %v156, %v155
    %v172 = vpack.c.b16 %v158, %v157
    %v173 = vpack.c.b16 %v160, %v159
    %v174 = vpack.c.b16 %v162, %v161
    %v175 = vpack.c.b16 %v164, %v163
    %v176 = vpack.c.b16 %v166, %v165
    %v177 = vpack.c.b16 %v168, %v167
    %v178 = vpack.c.b16 %v170, %v169
    %187 = vmatprep.subr.bf16.mxu0 0
    %188 = vmatpush1.bf16.msra.mxu0 %v178
    %189 = vmatprep.subr.bf16.mxu0 0
    %190 = vmatpush1.bf16.msra.mxu0 %v177
    %191 = vmatprep.subr.bf16.mxu0 0
    %192 = vmatpush1.bf16.msra.mxu0 %v176
    %193 = vmatprep.subr.bf16.mxu0 0
    %194 = vmatpush1.bf16.msra.mxu0 %v175
    %195 = vmatprep.subr.bf16.mxu0 0
    %196 = vmatpush1.bf16.msra.mxu0 %v174
    %197 = vmatprep.subr.bf16.mxu0 0
    %198 = vmatpush1.bf16.msra.mxu0 %v173
    %199 = vmatprep.subr.bf16.mxu0 0
    %200 = vmatpush1.bf16.msra.mxu0 %v172
    %201 = vmatprep.subr.bf16.mxu0 0
    %202 = vmatpush1.bf16.msra.mxu0 %v171
    %203 = vmatprep.subr.bf16.mxu0 0
    %204 = vmatpush2.bf16.msra.mxu0 0
    %205 = vmatprep.subr.bf16.mxu0 0
    %206 = vmatpush2.bf16.msra.mxu0 0
    %207 = vmatprep.subr.bf16.mxu0 0
    %208 = vmatpush2.bf16.msra.mxu0 0
    %209 = vmatprep.subr.bf16.mxu0 0
    %210 = vmatpush2.bf16.msra.mxu0 0
    %211 = vmatprep.subr.bf16.mxu0 0
    %212 = vmatpush2.bf16.msra.mxu0 0
    %213 = vmatprep.subr.bf16.mxu0 0
    %214 = vmatpush2.bf16.msra.mxu0 0
    %215 = vmatprep.subr.bf16.mxu0 0
    %216 = vmatpush2.bf16.msra.mxu0 0
    %217 = vmatprep.subr.bf16.mxu0 0
    %218 = vmatpush2.bf16.msra.mxu0 0
    %219 = vmatprep.mubr.bf16.mxu0 0
    %220 = vmatmul.mubr.bf16.gmra.mxu0 %v115
    %v221 = vpop.f32.mrf.mxu0
    %v222 = vadd.f32 %v137, %v221
    %v223 = vpop.f32.mrf.mxu0
    %v224 = vpop.f32.mrf.mxu0
    %v225 = vpop.f32.mrf.mxu0
    %226 = vdwg.mxu0
    %v227 = vmax.f32 %v222, 0.0
    %v228 = vpack.c.bf16 %v227, %v227
    %v229 = vld [vmem:[%s5] sm:$0xf]
    %v230 = vld [vmem:[%s5 + $0x4] sm:$0xf]
    %v231 = vld [vmem:[%s5 + $0x8] sm:$0xf]
    %v232 = vld [vmem:[%s5 + $0xc] sm:$0xf]
    %v233 = vld [vmem:[%s5 + $0x10] sm:$0xf]
    %v234 = vld [vmem:[%s5 + $0x14] sm:$0xf]
    %v235 = vld [vmem:[%s5 + $0x18] sm:$0xf]
    %v236 = vld [vmem:[%s5 + $0x1c] sm:$0xf]
    %v237 = vld [vmem:[%s5 + $0x20] sm:$0xf]
    %v238 = vld [vmem:[%s5 + $0x24] sm:$0xf]
    %v239 = vld [vmem:[%s5 + $0x28] sm:$0xf]
    %v240 = vld [vmem:[%s5 + $0x2c] sm:$0xf]
    %v241 = vld [vmem:[%s5 + $0x30] sm:$0xf]
    %v242 = vld [vmem:[%s5 + $0x34] sm:$0xf]
    %v243 = vld [vmem:[%s5 + $0x38] sm:$0xf]
    %v244 = vld [vmem:[%s5 + $0x3c] sm:$0xf]
    %v245 = vld [vmem:[%s6] sm:$0x1]
    %v247 = vlaneseq
    %v248 = vshrl.u32 %v247, 7
    %v249 = vsub.s32 0, %v248
    %v250 = vrot.slane %v245, %v249
    %v268 = vunpack.c.l.b16 %v229
    %v269 = vunpack.c.l.b16 %v230
    %v270 = vunpack.c.l.b16 %v231
    %v271 = vunpack.c.l.b16 %v232
    %v272 = vunpack.c.l.b16 %v233
    %v273 = vunpack.c.l.b16 %v234
    %v274 = vunpack.c.l.b16 %v235
    %v275 = vunpack.c.l.b16 %v236
    %v276 = vunpack.c.l.b16 %v237
    %v277 = vunpack.c.l.b16 %v238
    %v278 = vunpack.c.l.b16 %v239
    %v279 = vunpack.c.l.b16 %v240
    %v280 = vunpack.c.l.b16 %v241
    %v281 = vunpack.c.l.b16 %v242
    %v282 = vunpack.c.l.b16 %v243
    %v283 = vunpack.c.l.b16 %v244
    %v284 = vpack.c.b16 %v269, %v268
    %v285 = vpack.c.b16 %v271, %v270
    %v286 = vpack.c.b16 %v273, %v272
    %v287 = vpack.c.b16 %v275, %v274
    %v288 = vpack.c.b16 %v277, %v276
    %v289 = vpack.c.b16 %v279, %v278
    %v290 = vpack.c.b16 %v281, %v280
    %v291 = vpack.c.b16 %v283, %v282
    %300 = vmatprep.subr.bf16.mxu0 0
    %301 = vmatpush1.bf16.msra.mxu0 %v291
    %302 = vmatprep.subr.bf16.mxu0 0
    %303 = vmatpush1.bf16.msra.mxu0 %v290
    %304 = vmatprep.subr.bf16.mxu0 0
    %305 = vmatpush1.bf16.msra.mxu0 %v289
    %306 = vmatprep.subr.bf16.mxu0 0
    %307 = vmatpush1.bf16.msra.mxu0 %v288
    %308 = vmatprep.subr.bf16.mxu0 0
    %309 = vmatpush1.bf16.msra.mxu0 %v287
    %310 = vmatprep.subr.bf16.mxu0 0
    %311 = vmatpush1.bf16.msra.mxu0 %v286
    %312 = vmatprep.subr.bf16.mxu0 0
    %313 = vmatpush1.bf16.msra.mxu0 %v285
    %314 = vmatprep.subr.bf16.mxu0 0
    %315 = vmatpush1.bf16.msra.mxu0 %v284
    %316 = vmatprep.subr.bf16.mxu0 0
    %317 = vmatpush2.bf16.msra.mxu0 0
    %318 = vmatprep.subr.bf16.mxu0 0
    %319 = vmatpush2.bf16.msra.mxu0 0
    %320 = vmatprep.subr.bf16.mxu0 0
    %321 = vmatpush2.bf16.msra.mxu0 0
    %322 = vmatprep.subr.bf16.mxu0 0
    %323 = vmatpush2.bf16.msra.mxu0 0
    %324 = vmatprep.subr.bf16.mxu0 0
    %325 = vmatpush2.bf16.msra.mxu0 0
    %326 = vmatprep.subr.bf16.mxu0 0
    %327 = vmatpush2.bf16.msra.mxu0 0
    %328 = vmatprep.subr.bf16.mxu0 0
    %329 = vmatpush2.bf16.msra.mxu0 0
    %330 = vmatprep.subr.bf16.mxu0 0
    %331 = vmatpush2.bf16.msra.mxu0 0
    %332 = vmatprep.mubr.bf16.mxu0 0
    %333 = vmatmul.mubr.bf16.gmra.mxu0 %v228
    %v334 = vpop.f32.mrf.mxu0
    %v335 = vadd.f32 %v250, %v334
    %v336 = vpop.f32.mrf.mxu0
    %v337 = vpop.f32.mrf.mxu0
    %v338 = vpop.f32.mrf.mxu0
    %339 = vdwg.mxu0
    %vm340 = vcmask 31744
    %341 = vst.msk [vmem:[%s7] sm:$0xff] %vm340, %v335
    // Predicated region
    $region38: #{tpu_custom_call.1} parent=1 // pred_check
      _
    $region39: #{tpu_custom_call.1} parent=1 // pred_check_branch
      %343 = sbr.rel (0) target = $region41
    $region40: #{tpu_custom_call.1} parent=1 // pred_region
      _
    $region41: #{tpu_custom_call.1} parent=1 // pred_fallthru
      _
    // Predicated region
    $region42: #{tpu_custom_call.1} parent=1 // pred_check
      _
    $region43: #{tpu_custom_call.1} parent=1 // pred_check_branch
      %345 = sbr.rel (0) target = $region45
    $region44: #{tpu_custom_call.1} parent=1 // pred_region
      _
    $region45: #{tpu_custom_call.1} parent=1 // pred_fallthru
      _
    %346 = vsyncpa [#allocation3], 1
    %347 = vsyncpa [#allocation5], 1

</llo_original>
